<compile_context>
chip_gen: v7x
topology: tpu7x:2x2x1
jax: 0.10.0
libtpu: 0.0.40
codegen_flags: <defaults>
</compile_context>

<pallas_src>
import functools

import jax
import jax.numpy as jnp
from jax.experimental import pallas as pl
from jax.experimental.pallas import tpu as pltpu


def _shortcut_a_kernel(x_ref, s_ref, o_ref, *, pad):
    # x_ref: (B, C, HW)        flattened-spatial input block
    # s_ref: (HW, HW_out)      0/1 selection matrix (the fused ::2,::2 gather)
    # o_ref: (B, C_out, HW_out) flattened-spatial padded output block
    B, C, HW = x_ref.shape
    _, C_out, HW_out = o_ref.shape

    # Merge leading dims only (no lane-dim relayout), single MXU pass.
    x = x_ref[...].reshape(B * C, HW).astype(jnp.float32)
    y = jnp.dot(x, s_ref[...], preferred_element_type=jnp.float32)  # (B*C, HW_out)
    y = y.reshape(B, C, HW_out).astype(o_ref.dtype)

    # Write each output byte exactly once: zero pad bands + data band.
    if pad > 0:
        zeros = jnp.zeros((B, pad, HW_out), o_ref.dtype)
        o_ref[:, :pad, :] = zeros
        o_ref[:, pad + C:, :] = zeros
    o_ref[:, pad:pad + C, :] = y


def lambda_layer_shortcut_a(x, planes):
    """Pallas equivalent of
       LambdaLayer(lambda x: F.pad(x[:, :, ::2, ::2],
                                   (0,0,0,0, planes//4, planes//4), "constant", 0))."""
    N, C, H, W = x.shape
    pad = planes // 4
    H_out, W_out = (H + 1) // 2, (W + 1) // 2
    C_out = C + 2 * pad

    # Odd spatial sizes (never hit in ResNet-20): pad by one; the padded
    # row/col is never selected by the even-index subsample.
    if (H % 2) or (W % 2):
        x = jnp.pad(x, ((0, 0), (0, 0), (0, H % 2), (0, W % 2)))
    He, We = x.shape[2], x.shape[3]
    HW, HW_out = He * We, H_out * W_out

    # Free row-major metadata reshape -> lane-dense kernel loads.
    x_flat = x.reshape(N, C, HW)

    # 0/1 selection matrix: sel[k, j] = 1 iff flat input index k maps to flat
    # output index j under the (::2, ::2) subsample.  Built once, passed in.
    k = jnp.arange(HW, dtype=jnp.int32)[:, None]
    j = jnp.arange(HW_out, dtype=jnp.int32)[None, :]
    src = 2 * (j // W_out) * We + 2 * (j % W_out)
    sel = (k == src).astype(jnp.float32)                      # (HW, HW_out)

    # Batch samples per grid step: as many as fit a conservative VMEM budget
    # (double-buffered in+out), capped, and forced to divide N so every block
    # is full.  16 MiB budget also leaves headroom on v7x (32 MiB scoped).
    itemsize = jnp.dtype(x.dtype).itemsize
    per_sample = 2 * (C * HW + C_out * HW_out) * itemsize
    b_blk = max(1, min(N, 128, int((16 * 1024 * 1024) // max(per_sample, 1))))
    while N % b_blk:
        b_blk -= 1

    kernel = functools.partial(_shortcut_a_kernel, pad=pad)
    out_flat = pl.pallas_call(
        kernel,
        out_shape=jax.ShapeDtypeStruct((N, C_out, HW_out), x.dtype),
        grid_spec=pltpu.PrefetchScalarGridSpec(
            num_scalar_prefetch=0,
            grid=(N // b_blk,),
            in_specs=[
                pl.BlockSpec((b_blk, C, HW), lambda n: (n, 0, 0)),
                pl.BlockSpec((HW, HW_out), lambda n: (0, 0)),   # constant -> fetched once
            ],
            out_specs=pl.BlockSpec((b_blk, C_out, HW_out), lambda n: (n, 0, 0)),
        ),
        compiler_params=pltpu.CompilerParams(
            dimension_semantics=("parallel",)),
    )(x_flat, sel)

    return out_flat.reshape(N, C_out, H_out, W_out)


def _reference(x, planes):
    pad = planes // 4
    return jnp.pad(x[:, :, ::2, ::2], ((0, 0), (pad, pad), (0, 0), (0, 0)))


if __name__ == "__main__":
    key = jax.random.PRNGKey(0)
    cases = [
        ((2, 4, 16, 16), 8),     # small smoke-test shape
        ((2, 16, 32, 32), 32),   # real ResNet-20 first downsample shortcut (16->32)
        ((2, 4, 15, 15), 8),     # odd spatial-size fallback path
    ]
    for shape, planes in cases:
        key, sub = jax.random.split(key)
        x = jax.random.normal(sub, shape, dtype=jnp.float32)
        out = jax.block_until_ready(lambda_layer_shortcut_a(x, planes))
        ref = _reference(x, planes)
        assert out.shape == ref.shape, (out.shape, ref.shape)
        assert out.dtype == ref.dtype
        assert jnp.array_equal(out, ref), f"mismatch vs reference for {shape}, planes={planes}"

    print("KERNEL_OK")
</pallas_src>

<mosaic_0001>
module attributes {stable_mosaic.version = 11 : i64} {
  func.func @_shortcut_a_kernel(%arg0: i32, %arg1: memref<2x4x256xf32, #tpu.memory_space<vmem>>, %arg2: memref<256x64xf32, #tpu.memory_space<vmem>>, %arg3: memref<2x8x64xf32, #tpu.memory_space<vmem>>) attributes {dimension_semantics = [#tpu.dimension_semantics<parallel>], iteration_bounds = array<i64: 1>, scalar_prefetch = 0 : i64, scratch_operands = 0 : i64, tpu.core_type = #tpu.core_type<tc>, window_params = [{transform_indices = @transform_0, window_bounds = array<i64: 2, 4, 256>}, {pipeline_mode = #tpu.pipeline_mode<synchronous>, transform_indices = @transform_1, window_bounds = array<i64: 256, 64>}, {transform_indices = @transform_2, window_bounds = array<i64: 2, 8, 64>}]} {
    %c0 = arith.constant 0 : index
    %c0_0 = arith.constant 0 : index
    %c0_1 = arith.constant 0 : index
    %0 = vector.load %arg1[%c0, %c0_0, %c0_1] : memref<2x4x256xf32, #tpu.memory_space<vmem>>, vector<2x4x256xf32>
    %1 = vector.shape_cast %0 : vector<2x4x256xf32> to vector<8x256xf32>
    %c0_2 = arith.constant 0 : index
    %c0_3 = arith.constant 0 : index
    %2 = vector.load %arg2[%c0_2, %c0_3] : memref<256x64xf32, #tpu.memory_space<vmem>>, vector<256x64xf32>
    %cst = arith.constant dense<0.000000e+00> : vector<8x64xf32>
    %3 = tpu.matmul %1, %2, %cst {dimension_numbers = #tpu.dot_dimension_numbers<[1], [0], [0], [1], [0, 0, 1, 1], [], []>} : vector<8x256xf32>, vector<256x64xf32>, vector<8x64xf32> -> vector<8x64xf32>
    %4 = vector.shape_cast %3 : vector<8x64xf32> to vector<2x4x64xf32>
    %cst_4 = arith.constant 0.000000e+00 : f32
    %5 = vector.broadcast %cst_4 : f32 to vector<2x2x64xf32>
    %c0_5 = arith.constant 0 : index
    %c0_6 = arith.constant 0 : index
    %c0_7 = arith.constant 0 : index
    %6 = vector.load %arg3[%c0_5, %c0_6, %c0_7] : memref<2x8x64xf32, #tpu.memory_space<vmem>>, vector<2x2x64xf32>
    tpu.vector_store %arg3[%c0_5, %c0_6, %c0_7], %5 {strides = array<i32>} : memref<2x8x64xf32, #tpu.memory_space<vmem>>, vector<2x2x64xf32>,
    %c0_8 = arith.constant 0 : index
    %c6 = arith.constant 6 : index
    %c0_9 = arith.constant 0 : index
    %7 = vector.load %arg3[%c0_8, %c6, %c0_9] : memref<2x8x64xf32, #tpu.memory_space<vmem>>, vector<2x2x64xf32>
    tpu.vector_store %arg3[%c0_8, %c6, %c0_9], %5 {strides = array<i32>} : memref<2x8x64xf32, #tpu.memory_space<vmem>>, vector<2x2x64xf32>,
    %c0_10 = arith.constant 0 : index
    %c2 = arith.constant 2 : index
    %c0_11 = arith.constant 0 : index
    %8 = vector.load %arg3[%c0_10, %c2, %c0_11] : memref<2x8x64xf32, #tpu.memory_space<vmem>>, vector<2x4x64xf32>
    tpu.vector_store %arg3[%c0_10, %c2, %c0_11], %4 {strides = array<i32>} : memref<2x8x64xf32, #tpu.memory_space<vmem>>, vector<2x4x64xf32>,
    return
  }
  func.func @transform_0(%arg0: i32) -> (i32, i32, i32) {
    %c0_i32 = arith.constant 0 : i32
    %c0_i32_0 = arith.constant 0 : i32
    %c0_i32_1 = arith.constant 0 : i32
    return %arg0, %c0_i32, %c0_i32_0 : i32, i32, i32
  }
  func.func @transform_1(%arg0: i32) -> (i32, i32) {
    %c0_i32 = arith.constant 0 : i32
    %c0_i32_0 = arith.constant 0 : i32
    %c0_i32_1 = arith.constant 0 : i32
    return %c0_i32, %c0_i32_0 : i32, i32
  }
  func.func @transform_2(%arg0: i32) -> (i32, i32, i32) {
    %c0_i32 = arith.constant 0 : i32
    %c0_i32_0 = arith.constant 0 : i32
    %c0_i32_1 = arith.constant 0 : i32
    return %arg0, %c0_i32, %c0_i32_0 : i32, i32, i32
  }
}

</mosaic_0001>

<llo_original>
// kernel: tpu_custom_call.1
$region0: #{tpu_custom_call.1}
  #allocation0 [shape = 'u32[]', space=smem, size = 0x4, offset = 0x4, fixed_abs, tag = 'smem constant byte address 0x4 - core index']
  #allocation1 [shape = 'u32[144,128]{1,0:T(1,128)}', space=vmem, size = 0x12000, scoped, tag = 'internal scratch']
  %s0 = inlined_call_operand.vmem [shape: f32[2,4,256], index: 0, kind: input, shape index: {}]
  %s1 = inlined_call_operand.vmem [shape: f32[256,64], index: 1, kind: input, shape index: {}]
  %s2 = inlined_call_operand.hbm [shape: f32[2,8,64], index: 2, kind: output, shape index: {}]
  %s3 = sld [smem:[#allocation0]]
  $region18: #{tpu_custom_call.1} parent=0
    _
  %s5 = ssub.s32 1, %s3
  %s6 = scalar_select 0, %s5, %s3
  $region1: #{tpu_custom_call.1} parent=0
    #allocation2 [shape = 'u8[8192]{0}', space=vmem, size = 0x2000, scoped, tag = 'output window, operand 0, single buffered']
    #allocation3 [shape = 's32[1]{0}', space=sflag, size = 0x4, scoped, tag = 'scoped memory for tpu_custom_call.1']
    %7 = vsyncpa [#allocation3], 0
    // Predicated region
    $region2: #{tpu_custom_call.1} parent=1 // pred_check
      _
    $region3: #{tpu_custom_call.1} parent=1 // pred_check_branch
      %9 = sbr.rel (0) target = $region5
    $region4: #{tpu_custom_call.1} parent=1 // pred_region
      _
    $region5: #{tpu_custom_call.1} parent=1 // pred_fallthru
      _
    // Predicated region
    $region6: #{tpu_custom_call.1} parent=1 // pred_check
      _
    $region7: #{tpu_custom_call.1} parent=1 // pred_check_branch
      %11 = sbr.rel (0) target = $region9
    $region8: #{tpu_custom_call.1} parent=1 // pred_region
      _
    $region9: #{tpu_custom_call.1} parent=1 // pred_fallthru
      _
    %v12 = vld [vmem:[%s0] sm:$0xff]
    %v13 = vld [vmem:[%s0 + $0x8] sm:$0xff]
    %v14 = vld [vmem:[%s1] sm:$0xff]
    %v15 = vld [vmem:[%s1 + $0x8] sm:$0xff]
    %v16 = vld [vmem:[%s1 + $0x10] sm:$0xff]
    %v17 = vld [vmem:[%s1 + $0x18] sm:$0xff]
    %v18 = vld [vmem:[%s1 + $0x20] sm:$0xff]
    %v19 = vld [vmem:[%s1 + $0x28] sm:$0xff]
    %v20 = vld [vmem:[%s1 + $0x30] sm:$0xff]
    %v21 = vld [vmem:[%s1 + $0x38] sm:$0xff]
    %v22 = vld [vmem:[%s1 + $0x40] sm:$0xff]
    %v23 = vld [vmem:[%s1 + $0x48] sm:$0xff]
    %v24 = vld [vmem:[%s1 + $0x50] sm:$0xff]
    %v25 = vld [vmem:[%s1 + $0x58] sm:$0xff]
    %v26 = vld [vmem:[%s1 + $0x60] sm:$0xff]
    %v27 = vld [vmem:[%s1 + $0x68] sm:$0xff]
    %v28 = vld [vmem:[%s1 + $0x70] sm:$0xff]
    %v29 = vld [vmem:[%s1 + $0x78] sm:$0xff]
    %v30 = vld [vmem:[%s1 + $0x80] sm:$0xff]
    %v31 = vld [vmem:[%s1 + $0x88] sm:$0xff]
    %v32 = vld [vmem:[%s1 + $0x90] sm:$0xff]
    %v33 = vld [vmem:[%s1 + $0x98] sm:$0xff]
    %v34 = vld [vmem:[%s1 + $0xa0] sm:$0xff]
    %v35 = vld [vmem:[%s1 + $0xa8] sm:$0xff]
    %v36 = vld [vmem:[%s1 + $0xb0] sm:$0xff]
    %v37 = vld [vmem:[%s1 + $0xb8] sm:$0xff]
    %v38 = vld [vmem:[%s1 + $0xc0] sm:$0xff]
    %v39 = vld [vmem:[%s1 + $0xc8] sm:$0xff]
    %v40 = vld [vmem:[%s1 + $0xd0] sm:$0xff]
    %v41 = vld [vmem:[%s1 + $0xd8] sm:$0xff]
    %v42 = vld [vmem:[%s1 + $0xe0] sm:$0xff]
    %v43 = vld [vmem:[%s1 + $0xe8] sm:$0xff]
    %v44 = vld [vmem:[%s1 + $0xf0] sm:$0xff]
    %v45 = vld [vmem:[%s1 + $0xf8] sm:$0xff]
    %v48 = vcombine.low %v12, %v13
    %v49 = vcombine.high %v12, %v13
    %52 = vmatprep.subr.mxu0 0.0
    %53 = vmatpush1.msra.mxu0 %v14
    %54 = vmatprep.subr.mxu0 0.0
    %55 = vmatpush1.msra.mxu0 %v15
    %56 = vmatprep.subr.mxu0 0.0
    %57 = vmatpush1.msra.mxu0 %v16
    %58 = vmatprep.subr.mxu0 0.0
    %59 = vmatpush1.msra.mxu0 %v17
    %60 = vmatprep.subr.mxu0 0.0
    %61 = vmatpush1.msra.mxu0 %v18
    %62 = vmatprep.subr.mxu0 0.0
    %63 = vmatpush1.msra.mxu0 %v19
    %64 = vmatprep.subr.mxu0 0.0
    %65 = vmatpush1.msra.mxu0 %v20
    %66 = vmatprep.subr.mxu0 0.0
    %67 = vmatpush1.msra.mxu0 %v21
    %68 = vmatprep.subr.mxu0 0.0
    %69 = vmatpush1.msra.mxu0 %v22
    %70 = vmatprep.subr.mxu0 0.0
    %71 = vmatpush1.msra.mxu0 %v23
    %72 = vmatprep.subr.mxu0 0.0
    %73 = vmatpush1.msra.mxu0 %v24
    %74 = vmatprep.subr.mxu0 0.0
    %75 = vmatpush1.msra.mxu0 %v25
    %76 = vmatprep.subr.mxu0 0.0
    %77 = vmatpush1.msra.mxu0 %v26
    %78 = vmatprep.subr.mxu0 0.0
    %79 = vmatpush1.msra.mxu0 %v27
    %80 = vmatprep.subr.mxu0 0.0
    %81 = vmatpush1.msra.mxu0 %v28
    %82 = vmatprep.subr.mxu0 0.0
    %83 = vmatpush1.msra.mxu0 %v29
    %84 = vmatprep.subr.mxu0 0.0
    %85 = vmatpush1.msra.mxu0 %v30
    %86 = vmatprep.subr.mxu0 0.0
    %87 = vmatpush1.msra.mxu0 %v31
    %88 = vmatprep.subr.mxu0 0.0
    %89 = vmatpush1.msra.mxu0 %v32
    %90 = vmatprep.subr.mxu0 0.0
    %91 = vmatpush1.msra.mxu0 %v33
    %92 = vmatprep.subr.mxu0 0.0
    %93 = vmatpush1.msra.mxu0 %v34
    %94 = vmatprep.subr.mxu0 0.0
    %95 = vmatpush1.msra.mxu0 %v35
    %96 = vmatprep.subr.mxu0 0.0
    %97 = vmatpush1.msra.mxu0 %v36
    %98 = vmatprep.subr.mxu0 0.0
    %99 = vmatpush1.msra.mxu0 %v37
    %100 = vmatprep.subr.mxu0 0.0
    %101 = vmatpush1.msra.mxu0 %v38
    %102 = vmatprep.subr.mxu0 0.0
    %103 = vmatpush1.msra.mxu0 %v39
    %104 = vmatprep.subr.mxu0 0.0
    %105 = vmatpush1.msra.mxu0 %v40
    %106 = vmatprep.subr.mxu0 0.0
    %107 = vmatpush1.msra.mxu0 %v41
    %108 = vmatprep.subr.mxu0 0.0
    %109 = vmatpush1.msra.mxu0 %v42
    %110 = vmatprep.subr.mxu0 0.0
    %111 = vmatpush1.msra.mxu0 %v43
    %112 = vmatprep.subr.mxu0 0.0
    %113 = vmatpush1.msra.mxu0 %v44
    %114 = vmatprep.subr.mxu0 0.0
    %115 = vmatpush1.msra.mxu0 %v45
    %116 = vmatprep.mubr.f32.mxu0 %v49
    %117 = vmatmul.mubr.f32.gmra.mrb[0].mxu0 %v48
    %v118 = vpop.f32.mrb[0].mxu0
    %v119 = vadd.f32 0.0, %v118
    %v120 = vpop.f32.mrb[0].mxu0
    %121 = vdwg.mxu0
    %v123 = vcombine.high %v119, %v119
    %vm125 = vcmask 517120
    %126 = vst.msk [vmem:[#allocation2] sm:$0x3] %vm125, 0.0
    %127 = vst.msk [vmem:[#allocation2 + $0x8] sm:$0x3] %vm125, 0.0
    %128 = vst.msk [vmem:[#allocation2 + $0x6] sm:$0x3] %vm125, 0.0
    %129 = vst.msk [vmem:[#allocation2 + $0xe] sm:$0x3] %vm125, 0.0
    %vm130 = vcmask 519168
    %131 = vst.msk [vmem:[#allocation2 + $0x2] sm:$0xf] %vm130, %v119
    %132 = vst.msk [vmem:[#allocation2 + $0xa] sm:$0xf] %vm130, %v123
    // Predicated region
    $region10: #{tpu_custom_call.1} parent=1 // pred_check
      _
    $region11: #{tpu_custom_call.1} parent=1 // pred_check_branch
      %134 = sbr.rel (0) target = $region13
    $region12: #{tpu_custom_call.1} parent=1 // pred_region
      %s136 = ssub.s32 256, 256
      %137 = vsyncadd [#allocation3], %s136
      %s138 = sshll.u32 [#allocation2], 4
      %s139 = int_to_ptr.vmem [resolvable:$true] %s138
      %144 = dma.vmem_to_hbm [thread:$0]  %s139, 256, %s2, [#allocation3], 128, 128, 8
    $region13: #{tpu_custom_call.1} parent=1 // pred_fallthru
      _
    // Predicated region
    $region14: #{tpu_custom_call.1} parent=1 // pred_check
      _
    $region15: #{tpu_custom_call.1} parent=1 // pred_check_branch
      %146 = sbr.rel (0) target = $region17
    $region16: #{tpu_custom_call.1} parent=1 // pred_region
      %147 = dma.done [#allocation3], 256
    $region17: #{tpu_custom_call.1} parent=1 // pred_fallthru
      _
    %148 = vsyncpa [#allocation3], 1

</llo_original>
